<compile_context>
chip_gen: v7x
topology: tpu7x:2x2x1
jax: 0.10.0
libtpu: 0.0.40
codegen_flags: <defaults>
</compile_context>

<pallas_src>
import jax
import jax.numpy as jnp
from jax import lax
from jax.experimental import pallas as pl
from jax.experimental.pallas import tpu as pltpu


def _round_up(x, m):
    return (x + m - 1) // m * m


def _mlp_kernel(zt_ref, w1t_ref, b1_ref, w2_ref, b2_ref, o_ref):
    zt = zt_ref[...]                                 # (12, TILE_B) feature-major
    w1t = w1t_ref[...]                               # (32, 12)
    # Canonical MXU contraction: (32,12) @ (12,TILE_B) -> (32,TILE_B).
    # No relayout of the large activation operand is required.
    h = lax.dot_general(
        w1t, zt,
        dimension_numbers=(((1,), (0,)), ((), ())),
        preferred_element_type=jnp.float32)          # (32, TILE_B)
    h = jnp.maximum(h + b1_ref[...], 0.0)            # b1 (32, 1) lane-broadcast
    # Second layer (out_features = 1): weighted sublane reduce on VPU/XLU.
    y = jnp.sum(w2_ref[...] * h, axis=0, keepdims=True)     # (1, TILE_B)
    o_ref[...] = (y + b2_ref[0]).astype(o_ref.dtype)


def latent_predictor_x13_fm(zt, w1, b1, w2, b2, *,
                            tile_b=32768,
                            vmem_limit_bytes=48 * 1024 * 1024):
    """Feature-major fast path.

    zt: (12, B) float32  ->  (1, B) float32 (lane-dense, no padded relayout).
    w1: (12, 32), b1: (1, 32)/(32,), w2: (32, 1)/(32,), b2: (1, 1)/(1,).
    """
    d_in, B = zt.shape
    assert d_in == 12
    d_h = 32

    # Re-layout (tiny) parameters for the kernel.
    w1t = jnp.asarray(w1, jnp.float32).reshape(d_in, d_h).T      # (32, 12)
    b1c = jnp.asarray(b1, jnp.float32).reshape(d_h, 1)           # (32, 1)
    w2c = jnp.asarray(w2, jnp.float32).reshape(d_h, 1)           # (32, 1)
    b2s = jnp.asarray(b2, jnp.float32).reshape(1)                # (1,) -> SMEM

    # Batch tile: multiple of 128 (lane-dense blocks / output).  Ragged tail
    # is handled by the pipeline as a partial trailing block (no jnp.pad).
    tile = min(_round_up(tile_b, 128), _round_up(B, 128))
    grid = (pl.cdiv(B, tile),)

    out = pl.pallas_call(
        _mlp_kernel,
        out_shape=jax.ShapeDtypeStruct((1, B), jnp.float32),
        grid=grid,
        in_specs=[
            pl.BlockSpec((d_in, tile), lambda i: (0, i)),   # z tile (pipelined)
            pl.BlockSpec((d_h, d_in), lambda i: (0, 0)),    # W1^T (resident)
            pl.BlockSpec((d_h, 1), lambda i: (0, 0)),       # b1   (resident)
            pl.BlockSpec((d_h, 1), lambda i: (0, 0)),       # w2   (resident)
            pl.BlockSpec(memory_space=pltpu.SMEM),          # b2 scalar
        ],
        out_specs=pl.BlockSpec((1, tile), lambda i: (0, i)),
        compiler_params=pltpu.CompilerParams(
            dimension_semantics=("parallel",),
            vmem_limit_bytes=vmem_limit_bytes),
    )(zt, w1t, b1c, w2c, b2s)
    return out                                               # (1, B)


def latent_predictor_x13(z, w1, b1, w2, b2, *,
                         tile_b=32768,
                         vmem_limit_bytes=48 * 1024 * 1024):
    """PyTorch-fidelity wrapper: z (B, 12) float32 -> (B, 1) float32.

    Note: for best throughput produce z feature-major (12, B) upstream and
    call latent_predictor_x13_fm directly — that avoids the input transpose
    and the lane-padded (B, 1) output relayout done here for interface parity.
    """
    B, d_in = z.shape
    assert d_in == 12
    zt = jnp.asarray(z, jnp.float32).T                       # (12, B)
    out = latent_predictor_x13_fm(zt, w1, b1, w2, b2,
                                  tile_b=tile_b,
                                  vmem_limit_bytes=vmem_limit_bytes)
    return out[0].reshape(B, 1)


def init_params(key):
    """Deterministic init matching PyTorch nn.Linear shapes:
       fc.0: Linear(12, 32), fc.2: Linear(32, 1). Stored as (in, out)."""
    k1, k2, k3, k4 = jax.random.split(key, 4)
    bound1 = 1.0 / jnp.sqrt(12.0)
    bound2 = 1.0 / jnp.sqrt(32.0)
    w1 = jax.random.uniform(k1, (12, 32), jnp.float32, -bound1, bound1)
    b1 = jax.random.uniform(k2, (1, 32), jnp.float32, -bound1, bound1)
    w2 = jax.random.uniform(k3, (32, 1), jnp.float32, -bound2, bound2)
    b2 = jax.random.uniform(k4, (1, 1), jnp.float32, -bound2, bound2)
    return w1, b1, w2, b2


if __name__ == "__main__":
    key = jax.random.PRNGKey(0)
    pk, zk1, zk2 = jax.random.split(key, 3)
    w1, b1, w2, b2 = init_params(pk)

    def ref_fn(z):
        return jnp.maximum(z @ w1 + b1, 0.0) @ w2 + b2

    # Small-batch check (single partial block: 8 valid lanes of a 128-lane tile).
    B = 8
    z = jax.random.normal(zk1, (B, 12), jnp.float32)
    out = jax.block_until_ready(latent_predictor_x13(z, w1, b1, w2, b2))
    assert out.shape == (B, 1)
    assert jnp.allclose(out, ref_fn(z), atol=1e-5, rtol=1e-5)

    # Multi-tile + ragged-tail check (grid of 3 steps, last block partial).
    B2 = 300
    z2 = jax.random.normal(zk2, (B2, 12), jnp.float32)
    out2 = jax.block_until_ready(
        latent_predictor_x13(z2, w1, b1, w2, b2, tile_b=128))
    assert out2.shape == (B2, 1)
    assert jnp.allclose(out2, ref_fn(z2), atol=1e-5, rtol=1e-5)

    # Feature-major fast path (production layout: (12, B) in, (1, B) out).
    zt2 = z2.T
    out3 = jax.block_until_ready(
        latent_predictor_x13_fm(zt2, w1, b1, w2, b2, tile_b=128))
    assert out3.shape == (1, B2)
    assert jnp.allclose(out3[0], ref_fn(z2)[:, 0], atol=1e-5, rtol=1e-5)

    print("KERNEL_OK")
</pallas_src>

<mosaic_0001>
module attributes {stable_mosaic.version = 11 : i64} {
  func.func @_mlp_kernel(%arg0: i32, %arg1: memref<12x128xf32, #tpu.memory_space<vmem>>, %arg2: memref<32x12xf32, #tpu.memory_space<vmem>>, %arg3: memref<32x1xf32, #tpu.memory_space<vmem>>, %arg4: memref<32x1xf32, #tpu.memory_space<vmem>>, %arg5: memref<1xf32, #tpu.memory_space<smem>>, %arg6: memref<1x128xf32, #tpu.memory_space<vmem>>) attributes {dimension_semantics = [#tpu.dimension_semantics<parallel>], iteration_bounds = array<i64: 1>, scalar_prefetch = 0 : i64, scratch_operands = 0 : i64, tpu.core_type = #tpu.core_type<tc>, window_params = [{transform_indices = @transform_0, window_bounds = array<i64: 12, 128>}, {pipeline_mode = #tpu.pipeline_mode<synchronous>, transform_indices = @transform_1, window_bounds = array<i64: 32, 12>}, {pipeline_mode = #tpu.pipeline_mode<synchronous>, transform_indices = @transform_2, window_bounds = array<i64: 32, 1>}, {pipeline_mode = #tpu.pipeline_mode<synchronous>, transform_indices = @transform_3, window_bounds = array<i64: 32, 1>}, {transform_indices = @transform_4, window_bounds = array<i64: 1>}, {transform_indices = @transform_5, window_bounds = array<i64: 1, 128>}]} {
    %c0 = arith.constant 0 : index
    %c0_0 = arith.constant 0 : index
    %0 = vector.load %arg1[%c0, %c0_0] : memref<12x128xf32, #tpu.memory_space<vmem>>, vector<12x128xf32>
    %c0_1 = arith.constant 0 : index
    %c0_2 = arith.constant 0 : index
    %1 = vector.load %arg2[%c0_1, %c0_2] : memref<32x12xf32, #tpu.memory_space<vmem>>, vector<32x12xf32>
    %cst = arith.constant dense<0.000000e+00> : vector<32x128xf32>
    %2 = tpu.matmul %1, %0, %cst {dimension_numbers = #tpu.dot_dimension_numbers<[1], [0], [0], [1], [0, 0, 1, 1], [], []>} : vector<32x12xf32>, vector<12x128xf32>, vector<32x128xf32> -> vector<32x128xf32>
    %c0_3 = arith.constant 0 : index
    %c0_4 = arith.constant 0 : index
    %3 = vector.load %arg3[%c0_3, %c0_4] : memref<32x1xf32, #tpu.memory_space<vmem>>, vector<32x1xf32>
    %4 = vector.broadcast %3 : vector<32x1xf32> to vector<32x128xf32>
    %5 = arith.addf %2, %4 : vector<32x128xf32>
    %cst_5 = arith.constant 0.000000e+00 : f32
    %6 = vector.broadcast %cst_5 : f32 to vector<32x128xf32>
    %7 = arith.maximumf %5, %6 : vector<32x128xf32>
    %c0_6 = arith.constant 0 : index
    %c0_7 = arith.constant 0 : index
    %8 = vector.load %arg4[%c0_6, %c0_7] : memref<32x1xf32, #tpu.memory_space<vmem>>, vector<32x1xf32>
    %9 = vector.broadcast %8 : vector<32x1xf32> to vector<32x128xf32>
    %10 = arith.mulf %9, %7 : vector<32x128xf32>
    %cst_8 = arith.constant dense<0.000000e+00> : vector<128xf32>
    %11 = vector.multi_reduction <add>, %10, %cst_8 [0] : vector<32x128xf32> to vector<128xf32>
    %12 = vector.shape_cast %11 : vector<128xf32> to vector<1x128xf32>
    %c0_9 = arith.constant 0 : index
    %13 = memref.load %arg5[%c0_9] : memref<1xf32, #tpu.memory_space<smem>>
    %14 = vector.broadcast %13 : f32 to vector<1x128xf32>
    %15 = arith.addf %12, %14 : vector<1x128xf32>
    %c0_10 = arith.constant 0 : index
    %c0_11 = arith.constant 0 : index
    %16 = vector.load %arg6[%c0_10, %c0_11] : memref<1x128xf32, #tpu.memory_space<vmem>>, vector<1x128xf32>
    tpu.vector_store %arg6[%c0_10, %c0_11], %15 {strides = array<i32>} : memref<1x128xf32, #tpu.memory_space<vmem>>, vector<1x128xf32>,
    return
  }
  func.func @transform_0(%arg0: i32) -> (i32, i32) {
    %c0_i32 = arith.constant 0 : i32
    %c0_i32_0 = arith.constant 0 : i32
    return %c0_i32, %arg0 : i32, i32
  }
  func.func @transform_1(%arg0: i32) -> (i32, i32) {
    %c0_i32 = arith.constant 0 : i32
    %c0_i32_0 = arith.constant 0 : i32
    %c0_i32_1 = arith.constant 0 : i32
    return %c0_i32, %c0_i32_0 : i32, i32
  }
  func.func @transform_2(%arg0: i32) -> (i32, i32) {
    %c0_i32 = arith.constant 0 : i32
    %c0_i32_0 = arith.constant 0 : i32
    %c0_i32_1 = arith.constant 0 : i32
    return %c0_i32, %c0_i32_0 : i32, i32
  }
  func.func @transform_3(%arg0: i32) -> (i32, i32) {
    %c0_i32 = arith.constant 0 : i32
    %c0_i32_0 = arith.constant 0 : i32
    %c0_i32_1 = arith.constant 0 : i32
    return %c0_i32, %c0_i32_0 : i32, i32
  }
  func.func @transform_4(%arg0: i32) -> i32 {
    %c0_i32 = arith.constant 0 : i32
    %c0_i32_0 = arith.constant 0 : i32
    return %c0_i32 : i32
  }
  func.func @transform_5(%arg0: i32) -> (i32, i32) {
    %c0_i32 = arith.constant 0 : i32
    %c0_i32_0 = arith.constant 0 : i32
    return %c0_i32, %arg0 : i32, i32
  }
}

</mosaic_0001>

<llo_original>
// kernel: tpu_custom_call.1
$region0: #{tpu_custom_call.1}
  #allocation0 [shape = 'u32[]', space=smem, size = 0x4, offset = 0x4, fixed_abs, tag = 'smem constant byte address 0x4 - core index']
  #allocation1 [shape = 'u32[144,128]{1,0:T(1,128)}', space=vmem, size = 0x12000, scoped, tag = 'internal scratch']
  #allocation2 [shape = 'f32[1]{0:T(128)S(6)}', space=smem, size = 0x200, scoped, tag = 'scoped memory for tpu_custom_call.1']
  %s0 = inlined_call_operand.vmem [shape: f32[12,8], index: 0, kind: input, shape index: {}]
  %s1 = inlined_call_operand.vmem [shape: f32[32,12], index: 1, kind: input, shape index: {}]
  %s2 = inlined_call_operand.vmem [shape: f32[32,1], index: 2, kind: input, shape index: {}]
  %s3 = inlined_call_operand.vmem [shape: f32[32,1], index: 3, kind: input, shape index: {}]
  %s4 = inlined_call_operand.<no memory space> [shape: f32[1], index: 4, kind: input, shape index: {}]
  %s5 = inlined_call_operand.hbm [shape: f32[1,8], index: 5, kind: output, shape index: {}]
  %s6 = sld [smem:[#allocation0]]
  $region30: #{tpu_custom_call.1} parent=0
    _
  %s8 = ssub.s32 1, %s6
  %s9 = scalar_select 0, %s8, %s6
  %10 = sst [smem:[#allocation2]] %s4
  $region1: #{tpu_custom_call.1} parent=0
    #allocation3 [shape = 'u8[512]{0}', space=vmem, size = 0x400, scoped, tag = 'output window, operand 0, single buffered']
    #allocation4 [shape = 's32[1]{0}', space=sflag, size = 0x4, scoped, tag = 'scoped memory for tpu_custom_call.1']
    %11 = vsyncpa [#allocation4], 0
    // Predicated region
    $region2: #{tpu_custom_call.1} parent=1 // pred_check
      _
    $region3: #{tpu_custom_call.1} parent=1 // pred_check_branch
      %13 = sbr.rel (0) target = $region5
    $region4: #{tpu_custom_call.1} parent=1 // pred_region
      _
    $region5: #{tpu_custom_call.1} parent=1 // pred_fallthru
      _
    // Predicated region
    $region6: #{tpu_custom_call.1} parent=1 // pred_check
      _
    $region7: #{tpu_custom_call.1} parent=1 // pred_check_branch
      %15 = sbr.rel (0) target = $region9
    $region8: #{tpu_custom_call.1} parent=1 // pred_region
      _
    $region9: #{tpu_custom_call.1} parent=1 // pred_fallthru
      _
    // Predicated region
    $region10: #{tpu_custom_call.1} parent=1 // pred_check
      _
    $region11: #{tpu_custom_call.1} parent=1 // pred_check_branch
      %17 = sbr.rel (0) target = $region13
    $region12: #{tpu_custom_call.1} parent=1 // pred_region
      _
    $region13: #{tpu_custom_call.1} parent=1 // pred_fallthru
      _
    // Predicated region
    $region14: #{tpu_custom_call.1} parent=1 // pred_check
      _
    $region15: #{tpu_custom_call.1} parent=1 // pred_check_branch
      %19 = sbr.rel (0) target = $region17
    $region16: #{tpu_custom_call.1} parent=1 // pred_region
      _
    $region17: #{tpu_custom_call.1} parent=1 // pred_fallthru
      _
    // Predicated region
    $region18: #{tpu_custom_call.1} parent=1 // pred_check
      _
    $region19: #{tpu_custom_call.1} parent=1 // pred_check_branch
      %21 = sbr.rel (0) target = $region21
    $region20: #{tpu_custom_call.1} parent=1 // pred_region
      _
    $region21: #{tpu_custom_call.1} parent=1 // pred_fallthru
      _
    %v22 = vld [vmem:[%s0] sm:$0xff]
    %v23 = vld [vmem:[%s0 + $0x8] sm:$0xf]
    %v24 = vld [vmem:[%s1] sm:$0xff]
    %v25 = vld [vmem:[%s1 + $0x8] sm:$0xff]
    %v26 = vld [vmem:[%s1 + $0x10] sm:$0xff]
    %v27 = vld [vmem:[%s1 + $0x18] sm:$0xff]
    %v28 = vld [vmem:[%s2] sm:$0xff]
    %v29 = vld [vmem:[%s2 + $0x8] sm:$0xff]
    %v30 = vld [vmem:[%s2 + $0x10] sm:$0xff]
    %v31 = vld [vmem:[%s2 + $0x18] sm:$0xff]
    %33 = vset.pattern.permute.xlu0 0
    %34 = vperm.xlu0 %33, %v28
    %v35 = vpop.permute.xlu0 %34
    %38 = vset.pattern.permute.xlu0 0
    %39 = vperm.xlu0 %38, %v29
    %v40 = vpop.permute.xlu0 %39
    %43 = vset.pattern.permute.xlu0 0
    %44 = vperm.xlu0 %43, %v30
    %v45 = vpop.permute.xlu0 %44
    %48 = vset.pattern.permute.xlu0 0
    %49 = vperm.xlu0 %48, %v31
    %v50 = vpop.permute.xlu0 %49
    %vm52 = vcmask 97280
    %v54 = vsel %vm52, %v24, 0
    %v57 = vsel %vm52, %v25, 0
    %v60 = vsel %vm52, %v26, 0
    %v63 = vsel %vm52, %v27, 0
    %vm65 = vcmask 1043456
    %v67 = vsel %vm65, %v23, 0
    %69 = vmatprep.subr.mxu0 0.0
    %70 = vmatpush1.msra.mxu0 %v22
    %71 = vmatprep.subr.mxu0 0.0
    %72 = vmatpush1.msra.mxu0 %v67
    %73 = vmatprep.subr.mxu0 0.0
    %74 = vmatpush1.msra.mxu0 0.0
    %75 = vmatprep.subr.mxu0 0.0
    %76 = vmatpush1.msra.mxu0 0.0
    %77 = vmatprep.subr.mxu0 0.0
    %78 = vmatpush1.msra.mxu0 0.0
    %79 = vmatprep.subr.mxu0 0.0
    %80 = vmatpush1.msra.mxu0 0.0
    %81 = vmatprep.subr.mxu0 0.0
    %82 = vmatpush1.msra.mxu0 0.0
    %83 = vmatprep.subr.mxu0 0.0
    %84 = vmatpush1.msra.mxu0 0.0
    %85 = vmatprep.subr.mxu0 0.0
    %86 = vmatpush1.msra.mxu0 0.0
    %87 = vmatprep.subr.mxu0 0.0
    %88 = vmatpush1.msra.mxu0 0.0
    %89 = vmatprep.subr.mxu0 0.0
    %90 = vmatpush1.msra.mxu0 0.0
    %91 = vmatprep.subr.mxu0 0.0
    %92 = vmatpush1.msra.mxu0 0.0
    %93 = vmatprep.subr.mxu0 0.0
    %94 = vmatpush1.msra.mxu0 0.0
    %95 = vmatprep.subr.mxu0 0.0
    %96 = vmatpush1.msra.mxu0 0.0
    %97 = vmatprep.subr.mxu0 0.0
    %98 = vmatpush1.msra.mxu0 0.0
    %99 = vmatprep.subr.mxu0 0.0
    %100 = vmatpush1.msra.mxu0 0.0
    %101 = vmatprep.subr.mxu0 0.0
    %102 = vmatpush1.msra.mxu0 0.0
    %103 = vmatprep.subr.mxu0 0.0
    %104 = vmatpush1.msra.mxu0 0.0
    %105 = vmatprep.subr.mxu0 0.0
    %106 = vmatpush1.msra.mxu0 0.0
    %107 = vmatprep.subr.mxu0 0.0
    %108 = vmatpush1.msra.mxu0 0.0
    %109 = vmatprep.subr.mxu0 0.0
    %110 = vmatpush1.msra.mxu0 0.0
    %111 = vmatprep.subr.mxu0 0.0
    %112 = vmatpush1.msra.mxu0 0.0
    %113 = vmatprep.subr.mxu0 0.0
    %114 = vmatpush1.msra.mxu0 0.0
    %115 = vmatprep.subr.mxu0 0.0
    %116 = vmatpush1.msra.mxu0 0.0
    %117 = vmatprep.subr.mxu0 0.0
    %118 = vmatpush1.msra.mxu0 0.0
    %119 = vmatprep.subr.mxu0 0.0
    %120 = vmatpush1.msra.mxu0 0.0
    %121 = vmatprep.subr.mxu0 0.0
    %122 = vmatpush1.msra.mxu0 0.0
    %123 = vmatprep.subr.mxu0 0.0
    %124 = vmatpush1.msra.mxu0 0.0
    %125 = vmatprep.subr.mxu0 0.0
    %126 = vmatpush1.msra.mxu0 0.0
    %127 = vmatprep.subr.mxu0 0.0
    %128 = vmatpush1.msra.mxu0 0.0
    %129 = vmatprep.subr.mxu0 0.0
    %130 = vmatpush1.msra.mxu0 0.0
    %131 = vmatprep.subr.mxu0 0.0
    %132 = vmatpush1.msra.mxu0 0.0
    %133 = vmatprep.mubr.f32.mxu0 0.0
    %134 = vmatmul.mubr.f32.gmra.mrb[0].mxu0 %v54
    %v135 = vpop.f32.mrb[0].mxu0
    %v136 = vadd.f32 %v35, %v135
    %v137 = vpop.f32.mrb[0].mxu0
    %138 = vmatprep.mubr.f32.mxu0 0.0
    %139 = vmatmul.mubr.f32.gmra.mrb[0].mxu0 %v57
    %v140 = vpop.f32.mrb[0].mxu0
    %v141 = vadd.f32 %v40, %v140
    %v142 = vpop.f32.mrb[0].mxu0
    %143 = vmatprep.mubr.f32.mxu0 0.0
    %144 = vmatmul.mubr.f32.gmra.mrb[0].mxu0 %v60
    %v145 = vpop.f32.mrb[0].mxu0
    %v146 = vadd.f32 %v45, %v145
    %v147 = vpop.f32.mrb[0].mxu0
    %148 = vmatprep.mubr.f32.mxu0 0.0
    %149 = vmatmul.mubr.f32.gmra.mrb[0].mxu0 %v63
    %v150 = vpop.f32.mrb[0].mxu0
    %v151 = vadd.f32 %v50, %v150
    %v152 = vpop.f32.mrb[0].mxu0
    %153 = vdwg.mxu0
    %v154 = vmax.f32 %v136, 0.0
    %v155 = vmax.f32 %v141, 0.0
    %v156 = vmax.f32 %v146, 0.0
    %v157 = vmax.f32 %v151, 0.0
    %v158 = vld [vmem:[%s3] sm:$0xff]
    %v159 = vld [vmem:[%s3 + $0x8] sm:$0xff]
    %v160 = vld [vmem:[%s3 + $0x10] sm:$0xff]
    %v161 = vld [vmem:[%s3 + $0x18] sm:$0xff]
    %163 = vset.pattern.permute.xlu0 0
    %164 = vperm.xlu0 %163, %v158
    %v165 = vpop.permute.xlu0 %164
    %168 = vset.pattern.permute.xlu0 0
    %169 = vperm.xlu0 %168, %v159
    %v170 = vpop.permute.xlu0 %169
    %173 = vset.pattern.permute.xlu0 0
    %174 = vperm.xlu0 %173, %v160
    %v175 = vpop.permute.xlu0 %174
    %178 = vset.pattern.permute.xlu0 0
    %179 = vperm.xlu0 %178, %v161
    %v180 = vpop.permute.xlu0 %179
    %v182 = vmul.f32 %v165, %v154
    %v183 = vmul.f32 %v170, %v155
    %v184 = vmul.f32 %v175, %v156
    %v185 = vmul.f32 %v180, %v157
    %v186 = vadd.f32 %v182, %v183
    %v187 = vadd.f32 %v186, %v184
    %v188 = vadd.f32 %v187, %v185
    %v189 = vrot.slane %v188, 4
    %v190 = vadd.f32 %v188, %v189
    %v191 = vrot.slane %v190, 2
    %v192 = vadd.f32 %v190, %v191
    %v193 = vrot.slane %v192, 1
    %v194 = vadd.f32 %v192, %v193
    %s195 = sld [smem:[#allocation2]]
    %v196 = vstv %s195
    %v197 = vadd.f32 %v194, %v196
    %198 = vst [vmem:[#allocation3] sm:$0x1] %v197
    // Predicated region
    $region22: #{tpu_custom_call.1} parent=1 // pred_check
      _
    $region23: #{tpu_custom_call.1} parent=1 // pred_check_branch
      %200 = sbr.rel (0) target = $region25
    $region24: #{tpu_custom_call.1} parent=1 // pred_region
      %s202 = ssub.s32 16, 16
      %203 = vsyncadd [#allocation4], %s202
      %s205 = sshll.u32 [#allocation3], 4
      %s206 = int_to_ptr.vmem [resolvable:$true] %s205
      %208 = dma.vmem_to_hbm [thread:$0]  %s206, 16, %s5, [#allocation4]
    $region25: #{tpu_custom_call.1} parent=1 // pred_fallthru
      _
    // Predicated region
    $region26: #{tpu_custom_call.1} parent=1 // pred_check
      _
    $region27: #{tpu_custom_call.1} parent=1 // pred_check_branch
      %210 = sbr.rel (0) target = $region29
    $region28: #{tpu_custom_call.1} parent=1 // pred_region
      %211 = dma.done [#allocation4], 16
    $region29: #{tpu_custom_call.1} parent=1 // pred_fallthru
      _
    %212 = vsyncpa [#allocation4], 1

</llo_original>
